<compile_context>
chip_gen: v7x
topology: tpu7x:2x2x1
jax: 0.10.0
libtpu: 0.0.40
codegen_flags: <defaults>
</compile_context>

<pallas_src>
import math
import functools

import jax
import jax.numpy as jnp
from jax.experimental import pallas as pl
from jax.experimental.pallas import tpu as pltpu

INPUT_SIZE = 7
FIRST_HIDDEN_LAYER_SIZE = 8
SECOND_HIDDEN_LAYER_SIZE = 8
OUTPUT_SIZE = 2


def _round_up(n, m):
    return ((n + m - 1) // m) * m


def _mlp_kernel(x_ref, w1a_ref, w2a_ref, w3a_ref, o_ref):
    """fc1 -> ReLU -> fc2 -> ReLU -> fc3 on one (TM, INPUT_SIZE+1) batch tile.

    x_ref : (TM, 8)   last column is 1.0 (bias lane)
    w1a   : (8, 9)    [:7,:8]=W1, [7,:8]=b1, [:,8]=pass-through for the ones lane
    w2a   : (9, 9)    [:8,:8]=W2, [8,:8]=b2, [:,8]=pass-through
    w3a   : (9, 2)    [:8,:] =W3, [8,:] =b3
    o_ref : (TM, 2)
    """
    wdt = w1a_ref.dtype
    x = x_ref[...]

    # h1_aug = [relu(x W1 + b1), 1]   (relu(1) == 1, so the ones lane survives)
    h1 = jnp.maximum(
        jnp.dot(x, w1a_ref[...], preferred_element_type=jnp.float32), 0.0)
    # h2_aug = [relu(h1 W2 + b2), 1]
    h2 = jnp.maximum(
        jnp.dot(h1.astype(wdt), w2a_ref[...],
                preferred_element_type=jnp.float32), 0.0)
    # out = h2 W3 + b3
    out = jnp.dot(h2.astype(wdt), w3a_ref[...],
                  preferred_element_type=jnp.float32)
    o_ref[...] = out.astype(o_ref.dtype)


def pack_params(params, dtype=jnp.float32):
    """Fold biases into augmented weight matrices (ones-lane trick)."""
    h1, h2 = FIRST_HIDDEN_LAYER_SIZE, SECOND_HIDDEN_LAYER_SIZE
    w1, b1 = params["w1"], params["b1"].reshape(-1)   # (7, 8), (8,)
    w2, b2 = params["w2"], params["b2"].reshape(-1)   # (8, 8), (8,)
    w3, b3 = params["w3"], params["b3"].reshape(-1)   # (8, 2), (2,)

    w1a = jnp.zeros((INPUT_SIZE + 1, h1 + 1), jnp.float32)
    w1a = w1a.at[:INPUT_SIZE, :h1].set(w1)
    w1a = w1a.at[INPUT_SIZE, :h1].set(b1)
    w1a = w1a.at[INPUT_SIZE, h1].set(1.0)              # ones-lane pass-through

    w2a = jnp.zeros((h1 + 1, h2 + 1), jnp.float32)
    w2a = w2a.at[:h1, :h2].set(w2)
    w2a = w2a.at[h1, :h2].set(b2)
    w2a = w2a.at[h1, h2].set(1.0)                      # ones-lane pass-through

    w3a = jnp.zeros((h2 + 1, OUTPUT_SIZE), jnp.float32)
    w3a = w3a.at[:h2, :].set(w3)
    w3a = w3a.at[h2, :].set(b3)

    return w1a.astype(dtype), w2a.astype(dtype), w3a.astype(dtype)


@functools.partial(jax.jit, static_argnames=("tm", "dtype"))
def network_forward(x, params, *, tm=4096, dtype=jnp.float32):
    """x: (B, INPUT_SIZE) float32. Returns (B, OUTPUT_SIZE) float32.

    dtype: storage/MXU dtype for x and weights (jnp.float32 or jnp.bfloat16);
    accumulation is always f32.
    """
    B = x.shape[0]
    w1a, w2a, w3a = pack_params(params, dtype)

    # Append the ones column (folds b1 into the first dot; aligns K to 8).
    x_aug = jnp.concatenate(
        [x.astype(dtype), jnp.ones((B, 1), dtype)], axis=1)  # (B, 8)

    # Batch tile: multiple of 8 sublanes; cap at ceil(B/2) so mid-size batches
    # keep >= 2 grid steps (lets v7x shard the batch across both TCs).
    half = _round_up(max(-(-B // 2), 1), 8)
    tm_eff = max(8, min(tm, half))
    b_pad = _round_up(B, tm_eff)
    if b_pad != B:
        x_aug = jnp.pad(x_aug, ((0, b_pad - B), (0, 0)))

    grid = (b_pad // tm_eff,)
    out = pl.pallas_call(
        _mlp_kernel,
        out_shape=jax.ShapeDtypeStruct((b_pad, OUTPUT_SIZE), jnp.float32),
        grid=grid,
        in_specs=[
            # x: streamed per grid step (double-buffered by Pallas).
            pl.BlockSpec((tm_eff, INPUT_SIZE + 1), lambda i: (i, 0)),
            # Weights: constant block index -> VMEM-resident across all steps.
            pl.BlockSpec(w1a.shape, lambda i: (0, 0)),
            pl.BlockSpec(w2a.shape, lambda i: (0, 0)),
            pl.BlockSpec(w3a.shape, lambda i: (0, 0)),
        ],
        # Direct narrow output: last dim equals the full array dim, so the
        # block is legal and HBM writeback is exactly 8 B/row (no 128-lane slab).
        out_specs=pl.BlockSpec((tm_eff, OUTPUT_SIZE), lambda i: (i, 0)),
        compiler_params=pltpu.CompilerParams(
            dimension_semantics=("parallel",),      # shard batch steps (v7x)
            vmem_limit_bytes=32 * 1024 * 1024,      # room for tm up to ~8192
        ),
    )(x_aug, w1a, w2a, w3a)

    return out[:B]


def init_params(key):
    """Deterministic init mirroring nn.Linear default: U(-1/sqrt(fan_in), ...)."""
    def linear(key, fan_in, fan_out):
        kw, kb = jax.random.split(key)
        bound = 1.0 / math.sqrt(fan_in)
        w = jax.random.uniform(kw, (fan_in, fan_out), jnp.float32, -bound, bound)
        b = jax.random.uniform(kb, (1, fan_out), jnp.float32, -bound, bound)
        return w, b

    k1, k2, k3 = jax.random.split(key, 3)
    w1, b1 = linear(k1, INPUT_SIZE, FIRST_HIDDEN_LAYER_SIZE)
    w2, b2 = linear(k2, FIRST_HIDDEN_LAYER_SIZE, SECOND_HIDDEN_LAYER_SIZE)
    w3, b3 = linear(k3, SECOND_HIDDEN_LAYER_SIZE, OUTPUT_SIZE)
    return {"w1": w1, "b1": b1, "w2": w2, "b2": b2, "w3": w3, "b3": b3}


def _reference(x, params):
    h = jnp.maximum(x @ params["w1"] + params["b1"], 0.0)
    h = jnp.maximum(h @ params["w2"] + params["b2"], 0.0)
    return h @ params["w3"] + params["b3"]


if __name__ == "__main__":
    key = jax.random.PRNGKey(0)
    kx, kp, kx2 = jax.random.split(key, 3)
    params = init_params(kp)

    # Small batch (single grid step), f32.
    B = 8
    x = jax.random.normal(kx, (B, INPUT_SIZE), jnp.float32)
    out = jax.block_until_ready(network_forward(x, params))
    ref = _reference(x, params)
    assert out.shape == (B, OUTPUT_SIZE)
    assert jnp.allclose(out, ref, atol=1e-5, rtol=1e-5)

    # Larger, non-multiple batch to exercise the batch grid + padding path, f32.
    B2 = 520
    x2 = jax.random.normal(kx2, (B2, INPUT_SIZE), jnp.float32)
    out2 = jax.block_until_ready(network_forward(x2, params, tm=256))
    ref2 = _reference(x2, params)
    assert out2.shape == (B2, OUTPUT_SIZE)
    assert jnp.allclose(out2, ref2, atol=1e-5, rtol=1e-5)

    # bf16 storage/MXU path (v6e/v7x suggestion); f32 accumulation, loose tol.
    out3 = jax.block_until_ready(network_forward(x2, params, dtype=jnp.bfloat16))
    assert out3.shape == (B2, OUTPUT_SIZE)
    assert jnp.allclose(out3, ref2, atol=1e-1, rtol=1e-1)

    print("KERNEL_OK")
</pallas_src>

<mosaic_0001>
module attributes {stable_mosaic.version = 11 : i64} {
  func.func @_mlp_kernel(%arg0: i32, %arg1: memref<8x8xf32, #tpu.memory_space<vmem>>, %arg2: memref<8x9xf32, #tpu.memory_space<vmem>>, %arg3: memref<9x9xf32, #tpu.memory_space<vmem>>, %arg4: memref<9x2xf32, #tpu.memory_space<vmem>>, %arg5: memref<8x2xf32, #tpu.memory_space<vmem>>) attributes {dimension_semantics = [#tpu.dimension_semantics<parallel>], iteration_bounds = array<i64: 1>, scalar_prefetch = 0 : i64, scratch_operands = 0 : i64, tpu.core_type = #tpu.core_type<tc>, window_params = [{transform_indices = @transform_0, window_bounds = array<i64: 8, 8>}, {pipeline_mode = #tpu.pipeline_mode<synchronous>, transform_indices = @transform_1, window_bounds = array<i64: 8, 9>}, {pipeline_mode = #tpu.pipeline_mode<synchronous>, transform_indices = @transform_2, window_bounds = array<i64: 9, 9>}, {pipeline_mode = #tpu.pipeline_mode<synchronous>, transform_indices = @transform_3, window_bounds = array<i64: 9, 2>}, {transform_indices = @transform_4, window_bounds = array<i64: 8, 2>}]} {
    %c0 = arith.constant 0 : index
    %c0_0 = arith.constant 0 : index
    %0 = vector.load %arg1[%c0, %c0_0] : memref<8x8xf32, #tpu.memory_space<vmem>>, vector<8x8xf32>
    %c0_1 = arith.constant 0 : index
    %c0_2 = arith.constant 0 : index
    %1 = vector.load %arg2[%c0_1, %c0_2] : memref<8x9xf32, #tpu.memory_space<vmem>>, vector<8x9xf32>
    %cst = arith.constant dense<0.000000e+00> : vector<8x9xf32>
    %2 = tpu.matmul %0, %1, %cst {dimension_numbers = #tpu.dot_dimension_numbers<[1], [0], [0], [1], [0, 0, 1, 1], [], []>} : vector<8x8xf32>, vector<8x9xf32>, vector<8x9xf32> -> vector<8x9xf32>
    %cst_3 = arith.constant 0.000000e+00 : f32
    %3 = vector.broadcast %cst_3 : f32 to vector<8x9xf32>
    %4 = arith.maximumf %2, %3 : vector<8x9xf32>
    %c0_4 = arith.constant 0 : index
    %c0_5 = arith.constant 0 : index
    %5 = vector.load %arg3[%c0_4, %c0_5] : memref<9x9xf32, #tpu.memory_space<vmem>>, vector<9x9xf32>
    %cst_6 = arith.constant dense<0.000000e+00> : vector<8x9xf32>
    %6 = tpu.matmul %4, %5, %cst_6 {dimension_numbers = #tpu.dot_dimension_numbers<[1], [0], [0], [1], [0, 0, 1, 1], [], []>} : vector<8x9xf32>, vector<9x9xf32>, vector<8x9xf32> -> vector<8x9xf32>
    %cst_7 = arith.constant 0.000000e+00 : f32
    %7 = vector.broadcast %cst_7 : f32 to vector<8x9xf32>
    %8 = arith.maximumf %6, %7 : vector<8x9xf32>
    %c0_8 = arith.constant 0 : index
    %c0_9 = arith.constant 0 : index
    %9 = vector.load %arg4[%c0_8, %c0_9] : memref<9x2xf32, #tpu.memory_space<vmem>>, vector<9x2xf32>
    %cst_10 = arith.constant dense<0.000000e+00> : vector<8x2xf32>
    %10 = tpu.matmul %8, %9, %cst_10 {dimension_numbers = #tpu.dot_dimension_numbers<[1], [0], [0], [1], [0, 0, 1, 1], [], []>} : vector<8x9xf32>, vector<9x2xf32>, vector<8x2xf32> -> vector<8x2xf32>
    %c0_11 = arith.constant 0 : index
    %c0_12 = arith.constant 0 : index
    %11 = vector.load %arg5[%c0_11, %c0_12] : memref<8x2xf32, #tpu.memory_space<vmem>>, vector<8x2xf32>
    tpu.vector_store %arg5[%c0_11, %c0_12], %10 {strides = array<i32>} : memref<8x2xf32, #tpu.memory_space<vmem>>, vector<8x2xf32>,
    return
  }
  func.func @transform_0(%arg0: i32) -> (i32, i32) {
    %c0_i32 = arith.constant 0 : i32
    %c0_i32_0 = arith.constant 0 : i32
    return %arg0, %c0_i32 : i32, i32
  }
  func.func @transform_1(%arg0: i32) -> (i32, i32) {
    %c0_i32 = arith.constant 0 : i32
    %c0_i32_0 = arith.constant 0 : i32
    %c0_i32_1 = arith.constant 0 : i32
    return %c0_i32, %c0_i32_0 : i32, i32
  }
  func.func @transform_2(%arg0: i32) -> (i32, i32) {
    %c0_i32 = arith.constant 0 : i32
    %c0_i32_0 = arith.constant 0 : i32
    %c0_i32_1 = arith.constant 0 : i32
    return %c0_i32, %c0_i32_0 : i32, i32
  }
  func.func @transform_3(%arg0: i32) -> (i32, i32) {
    %c0_i32 = arith.constant 0 : i32
    %c0_i32_0 = arith.constant 0 : i32
    %c0_i32_1 = arith.constant 0 : i32
    return %c0_i32, %c0_i32_0 : i32, i32
  }
  func.func @transform_4(%arg0: i32) -> (i32, i32) {
    %c0_i32 = arith.constant 0 : i32
    %c0_i32_0 = arith.constant 0 : i32
    return %arg0, %c0_i32 : i32, i32
  }
}

</mosaic_0001>

<llo_original>
// kernel: network_forward.1
$region0: #{network_forward.1}
  #allocation0 [shape = 'u32[]', space=smem, size = 0x4, offset = 0x4, fixed_abs, tag = 'smem constant byte address 0x4 - core index']
  #allocation1 [shape = 'u32[144,128]{1,0:T(1,128)}', space=vmem, size = 0x12000, scoped, tag = 'internal scratch']
  %s0 = inlined_call_operand.vmem [shape: f32[8,8], index: 0, kind: input, shape index: {}]
  %s1 = inlined_call_operand.vmem [shape: f32[8,9], index: 1, kind: input, shape index: {}]
  %s2 = inlined_call_operand.vmem [shape: f32[9,9], index: 2, kind: input, shape index: {}]
  %s3 = inlined_call_operand.vmem [shape: f32[9,2], index: 3, kind: input, shape index: {}]
  %s4 = inlined_call_operand.vmem [shape: f32[8,2], index: 4, kind: output, shape index: {}]
  %s5 = sld [smem:[#allocation0]]
  $region26: #{network_forward.1} parent=0
    _
  %s7 = ssub.s32 1, %s5
  %s8 = scalar_select 0, %s7, %s5
  // Predicated region
  $region2: #{network_forward.1} parent=0 // pred_check
    _
  $region3: #{network_forward.1} parent=0 // pred_check_branch
    %10 = sbr.rel (0) target = $region5
  $region4: #{network_forward.1} parent=0 // pred_region
    _
  $region5: #{network_forward.1} parent=0 // pred_fallthru
    _
  // Predicated region
  $region6: #{network_forward.1} parent=0 // pred_check
    _
  $region7: #{network_forward.1} parent=0 // pred_check_branch
    %12 = sbr.rel (0) target = $region9
  $region8: #{network_forward.1} parent=0 // pred_region
    _
  $region9: #{network_forward.1} parent=0 // pred_fallthru
    _
  // Predicated region
  $region10: #{network_forward.1} parent=0 // pred_check
    _
  $region11: #{network_forward.1} parent=0 // pred_check_branch
    %14 = sbr.rel (0) target = $region13
  $region12: #{network_forward.1} parent=0 // pred_region
    _
  $region13: #{network_forward.1} parent=0 // pred_fallthru
    _
  // Predicated region
  $region14: #{network_forward.1} parent=0 // pred_check
    _
  $region15: #{network_forward.1} parent=0 // pred_check_branch
    %16 = sbr.rel (0) target = $region17
  $region16: #{network_forward.1} parent=0 // pred_region
    _
  $region17: #{network_forward.1} parent=0 // pred_fallthru
    _
  %v17 = vld [vmem:[%s0] sm:$0xff]
  %v18 = vld [vmem:[%s1] sm:$0xff]
  %vm19 = vcmask 64512
  %v21 = vsel %vm19, %v17, 0
  %23 = vmatprep.subr.mxu0 0.0
  %24 = vmatpush1.msra.mxu0 %v18
  %25 = vmatprep.subr.mxu0 0.0
  %26 = vmatpush1.msra.mxu0 0.0
  %27 = vmatprep.subr.mxu0 0.0
  %28 = vmatpush1.msra.mxu0 0.0
  %29 = vmatprep.subr.mxu0 0.0
  %30 = vmatpush1.msra.mxu0 0.0
  %31 = vmatprep.subr.mxu0 0.0
  %32 = vmatpush1.msra.mxu0 0.0
  %33 = vmatprep.subr.mxu0 0.0
  %34 = vmatpush1.msra.mxu0 0.0
  %35 = vmatprep.subr.mxu0 0.0
  %36 = vmatpush1.msra.mxu0 0.0
  %37 = vmatprep.subr.mxu0 0.0
  %38 = vmatpush1.msra.mxu0 0.0
  %39 = vmatprep.subr.mxu0 0.0
  %40 = vmatpush1.msra.mxu0 0.0
  %41 = vmatprep.subr.mxu0 0.0
  %42 = vmatpush1.msra.mxu0 0.0
  %43 = vmatprep.subr.mxu0 0.0
  %44 = vmatpush1.msra.mxu0 0.0
  %45 = vmatprep.subr.mxu0 0.0
  %46 = vmatpush1.msra.mxu0 0.0
  %47 = vmatprep.subr.mxu0 0.0
  %48 = vmatpush1.msra.mxu0 0.0
  %49 = vmatprep.subr.mxu0 0.0
  %50 = vmatpush1.msra.mxu0 0.0
  %51 = vmatprep.subr.mxu0 0.0
  %52 = vmatpush1.msra.mxu0 0.0
  %53 = vmatprep.subr.mxu0 0.0
  %54 = vmatpush1.msra.mxu0 0.0
  %55 = vmatprep.subr.mxu0 0.0
  %56 = vmatpush1.msra.mxu0 0.0
  %57 = vmatprep.subr.mxu0 0.0
  %58 = vmatpush1.msra.mxu0 0.0
  %59 = vmatprep.subr.mxu0 0.0
  %60 = vmatpush1.msra.mxu0 0.0
  %61 = vmatprep.subr.mxu0 0.0
  %62 = vmatpush1.msra.mxu0 0.0
  %63 = vmatprep.subr.mxu0 0.0
  %64 = vmatpush1.msra.mxu0 0.0
  %65 = vmatprep.subr.mxu0 0.0
  %66 = vmatpush1.msra.mxu0 0.0
  %67 = vmatprep.subr.mxu0 0.0
  %68 = vmatpush1.msra.mxu0 0.0
  %69 = vmatprep.subr.mxu0 0.0
  %70 = vmatpush1.msra.mxu0 0.0
  %71 = vmatprep.subr.mxu0 0.0
  %72 = vmatpush1.msra.mxu0 0.0
  %73 = vmatprep.subr.mxu0 0.0
  %74 = vmatpush1.msra.mxu0 0.0
  %75 = vmatprep.subr.mxu0 0.0
  %76 = vmatpush1.msra.mxu0 0.0
  %77 = vmatprep.subr.mxu0 0.0
  %78 = vmatpush1.msra.mxu0 0.0
  %79 = vmatprep.subr.mxu0 0.0
  %80 = vmatpush1.msra.mxu0 0.0
  %81 = vmatprep.subr.mxu0 0.0
  %82 = vmatpush1.msra.mxu0 0.0
  %83 = vmatprep.subr.mxu0 0.0
  %84 = vmatpush1.msra.mxu0 0.0
  %85 = vmatprep.subr.mxu0 0.0
  %86 = vmatpush1.msra.mxu0 0.0
  %87 = vmatprep.mubr.f32.mxu0 0.0
  %88 = vmatmul.mubr.f32.gmra.mrb[0].mxu0 %v21
  %v89 = vpop.f32.mrb[0].mxu0
  %v90 = vadd.f32 0.0, %v89
  %v91 = vpop.f32.mrb[0].mxu0
  %92 = vdwg.mxu0
  %v93 = vmax.f32 %v90, 0.0
  %v94 = vld [vmem:[%s2] sm:$0xff]
  %v95 = vld [vmem:[%s2 + $0x8] sm:$0x1]
  %vm96 = vcmask 72704
  %v98 = vsel %vm96, %v93, 0
  %vm100 = vcmask 1040384
  %v102 = vsel %vm100, %v95, 0
  %104 = vmatprep.subr.mxu0 0.0
  %105 = vmatpush1.msra.mxu0 %v94
  %106 = vmatprep.subr.mxu0 0.0
  %107 = vmatpush1.msra.mxu0 %v102
  %108 = vmatprep.subr.mxu0 0.0
  %109 = vmatpush1.msra.mxu0 0.0
  %110 = vmatprep.subr.mxu0 0.0
  %111 = vmatpush1.msra.mxu0 0.0
  %112 = vmatprep.subr.mxu0 0.0
  %113 = vmatpush1.msra.mxu0 0.0
  %114 = vmatprep.subr.mxu0 0.0
  %115 = vmatpush1.msra.mxu0 0.0
  %116 = vmatprep.subr.mxu0 0.0
  %117 = vmatpush1.msra.mxu0 0.0
  %118 = vmatprep.subr.mxu0 0.0
  %119 = vmatpush1.msra.mxu0 0.0
  %120 = vmatprep.subr.mxu0 0.0
  %121 = vmatpush1.msra.mxu0 0.0
  %122 = vmatprep.subr.mxu0 0.0
  %123 = vmatpush1.msra.mxu0 0.0
  %124 = vmatprep.subr.mxu0 0.0
  %125 = vmatpush1.msra.mxu0 0.0
  %126 = vmatprep.subr.mxu0 0.0
  %127 = vmatpush1.msra.mxu0 0.0
  %128 = vmatprep.subr.mxu0 0.0
  %129 = vmatpush1.msra.mxu0 0.0
  %130 = vmatprep.subr.mxu0 0.0
  %131 = vmatpush1.msra.mxu0 0.0
  %132 = vmatprep.subr.mxu0 0.0
  %133 = vmatpush1.msra.mxu0 0.0
  %134 = vmatprep.subr.mxu0 0.0
  %135 = vmatpush1.msra.mxu0 0.0
  %136 = vmatprep.subr.mxu0 0.0
  %137 = vmatpush1.msra.mxu0 0.0
  %138 = vmatprep.subr.mxu0 0.0
  %139 = vmatpush1.msra.mxu0 0.0
  %140 = vmatprep.subr.mxu0 0.0
  %141 = vmatpush1.msra.mxu0 0.0
  %142 = vmatprep.subr.mxu0 0.0
  %143 = vmatpush1.msra.mxu0 0.0
  %144 = vmatprep.subr.mxu0 0.0
  %145 = vmatpush1.msra.mxu0 0.0
  %146 = vmatprep.subr.mxu0 0.0
  %147 = vmatpush1.msra.mxu0 0.0
  %148 = vmatprep.subr.mxu0 0.0
  %149 = vmatpush1.msra.mxu0 0.0
  %150 = vmatprep.subr.mxu0 0.0
  %151 = vmatpush1.msra.mxu0 0.0
  %152 = vmatprep.subr.mxu0 0.0
  %153 = vmatpush1.msra.mxu0 0.0
  %154 = vmatprep.subr.mxu0 0.0
  %155 = vmatpush1.msra.mxu0 0.0
  %156 = vmatprep.subr.mxu0 0.0
  %157 = vmatpush1.msra.mxu0 0.0
  %158 = vmatprep.subr.mxu0 0.0
  %159 = vmatpush1.msra.mxu0 0.0
  %160 = vmatprep.subr.mxu0 0.0
  %161 = vmatpush1.msra.mxu0 0.0
  %162 = vmatprep.subr.mxu0 0.0
  %163 = vmatpush1.msra.mxu0 0.0
  %164 = vmatprep.subr.mxu0 0.0
  %165 = vmatpush1.msra.mxu0 0.0
  %166 = vmatprep.subr.mxu0 0.0
  %167 = vmatpush1.msra.mxu0 0.0
  %168 = vmatprep.mubr.f32.mxu0 0.0
  %169 = vmatmul.mubr.f32.gmra.mrb[0].mxu0 %v98
  %v170 = vpop.f32.mrb[0].mxu0
  %v171 = vadd.f32 0.0, %v170
  %v172 = vpop.f32.mrb[0].mxu0
  %173 = vdwg.mxu0
  %v174 = vmax.f32 %v171, 0.0
  %v175 = vld [vmem:[%s3] sm:$0xff]
  %v176 = vld [vmem:[%s3 + $0x8] sm:$0x1]
  %v178 = vsel %vm96, %v174, 0
  %v181 = vsel %vm100, %v176, 0
  %183 = vmatprep.subr.mxu0 0.0
  %184 = vmatpush1.msra.mxu0 %v175
  %185 = vmatprep.subr.mxu0 0.0
  %186 = vmatpush1.msra.mxu0 %v181
  %187 = vmatprep.subr.mxu0 0.0
  %188 = vmatpush1.msra.mxu0 0.0
  %189 = vmatprep.subr.mxu0 0.0
  %190 = vmatpush1.msra.mxu0 0.0
  %191 = vmatprep.subr.mxu0 0.0
  %192 = vmatpush1.msra.mxu0 0.0
  %193 = vmatprep.subr.mxu0 0.0
  %194 = vmatpush1.msra.mxu0 0.0
  %195 = vmatprep.subr.mxu0 0.0
  %196 = vmatpush1.msra.mxu0 0.0
  %197 = vmatprep.subr.mxu0 0.0
  %198 = vmatpush1.msra.mxu0 0.0
  %199 = vmatprep.subr.mxu0 0.0
  %200 = vmatpush1.msra.mxu0 0.0
  %201 = vmatprep.subr.mxu0 0.0
  %202 = vmatpush1.msra.mxu0 0.0
  %203 = vmatprep.subr.mxu0 0.0
  %204 = vmatpush1.msra.mxu0 0.0
  %205 = vmatprep.subr.mxu0 0.0
  %206 = vmatpush1.msra.mxu0 0.0
  %207 = vmatprep.subr.mxu0 0.0
  %208 = vmatpush1.msra.mxu0 0.0
  %209 = vmatprep.subr.mxu0 0.0
  %210 = vmatpush1.msra.mxu0 0.0
  %211 = vmatprep.subr.mxu0 0.0
  %212 = vmatpush1.msra.mxu0 0.0
  %213 = vmatprep.subr.mxu0 0.0
  %214 = vmatpush1.msra.mxu0 0.0
  %215 = vmatprep.subr.mxu0 0.0
  %216 = vmatpush1.msra.mxu0 0.0
  %217 = vmatprep.subr.mxu0 0.0
  %218 = vmatpush1.msra.mxu0 0.0
  %219 = vmatprep.subr.mxu0 0.0
  %220 = vmatpush1.msra.mxu0 0.0
  %221 = vmatprep.subr.mxu0 0.0
  %222 = vmatpush1.msra.mxu0 0.0
  %223 = vmatprep.subr.mxu0 0.0
  %224 = vmatpush1.msra.mxu0 0.0
  %225 = vmatprep.subr.mxu0 0.0
  %226 = vmatpush1.msra.mxu0 0.0
  %227 = vmatprep.subr.mxu0 0.0
  %228 = vmatpush1.msra.mxu0 0.0
  %229 = vmatprep.subr.mxu0 0.0
  %230 = vmatpush1.msra.mxu0 0.0
  %231 = vmatprep.subr.mxu0 0.0
  %232 = vmatpush1.msra.mxu0 0.0
  %233 = vmatprep.subr.mxu0 0.0
  %234 = vmatpush1.msra.mxu0 0.0
  %235 = vmatprep.subr.mxu0 0.0
  %236 = vmatpush1.msra.mxu0 0.0
  %237 = vmatprep.subr.mxu0 0.0
  %238 = vmatpush1.msra.mxu0 0.0
  %239 = vmatprep.subr.mxu0 0.0
  %240 = vmatpush1.msra.mxu0 0.0
  %241 = vmatprep.subr.mxu0 0.0
  %242 = vmatpush1.msra.mxu0 0.0
  %243 = vmatprep.subr.mxu0 0.0
  %244 = vmatpush1.msra.mxu0 0.0
  %245 = vmatprep.subr.mxu0 0.0
  %246 = vmatpush1.msra.mxu0 0.0
  %247 = vmatprep.mubr.f32.mxu0 0.0
  %248 = vmatmul.mubr.f32.gmra.mrb[0].mxu0 %v178
  %v249 = vpop.f32.mrb[0].mxu0
  %v250 = vadd.f32 0.0, %v249
  %v251 = vpop.f32.mrb[0].mxu0
  %252 = vdwg.mxu0
  %vm253 = vcmask 15360
  %254 = vst.msk [vmem:[%s4] sm:$0xff] %vm253, %v250
  // Predicated region
  $region18: #{network_forward.1} parent=0 // pred_check
    _
  $region19: #{network_forward.1} parent=0 // pred_check_branch
    %256 = sbr.rel (0) target = $region21
  $region20: #{network_forward.1} parent=0 // pred_region
    _
  $region21: #{network_forward.1} parent=0 // pred_fallthru
    _
  // Predicated region
  $region22: #{network_forward.1} parent=0 // pred_check
    _
  $region23: #{network_forward.1} parent=0 // pred_check_branch
    %258 = sbr.rel (0) target = $region25
  $region24: #{network_forward.1} parent=0 // pred_region
    _
  $region25: #{network_forward.1} parent=0 // pred_fallthru
    _

</llo_original>
